<compile_context>
chip_gen: v6e
topology: v6e:2x2x1
jax: 0.10.0
libtpu: 0.0.40
codegen_flags: <defaults>
</compile_context>

<pallas_src>
import functools

import jax
import jax.numpy as jnp
from jax.experimental import pallas as pl
from jax.experimental.pallas import tpu as pltpu

_NEG_BIG = -1e30  # masks padded output lanes out of the softmax (keep finite!)


def _round_up(n, m):
    return ((n + m - 1) // m) * m


def _mlp_softmax_kernel(x_ref, w1_ref, b1_ref, w2_ref, b2_ref, w3_ref, b3_ref,
                        o_ref):
    """One (tb, in) activation tile through the whole MLP + softmax (weights resident)."""
    # x and weights are already in matmul_dtype (cast done once in the wrapper).
    h1 = jnp.dot(x_ref[...], w1_ref[...], preferred_element_type=jnp.float32)
    h1 = jnp.maximum(h1 + b1_ref[...], 0.0)                     # bias + ReLU in f32
    h2 = jnp.dot(h1.astype(w2_ref.dtype), w2_ref[...],
                 preferred_element_type=jnp.float32)
    h2 = jnp.maximum(h2 + b2_ref[...], 0.0)
    logits = jnp.dot(h2.astype(w3_ref.dtype), w3_ref[...],
                     preferred_element_type=jnp.float32)
    logits = logits + b3_ref[...]                               # padded lanes -> -1e30
    # softmax over last dim (PyTorch F.softmax on 2-D input -> dim=1)
    m = jnp.max(logits, axis=-1, keepdims=True)
    e = jnp.exp(logits - m)                                     # padded lanes exp to 0
    denom = jnp.sum(e, axis=-1, keepdims=True)
    # exact reciprocal (approx=True would loosen the 1e-5 tolerance)
    o_ref[...] = e * pl.reciprocal(denom, approx=False)


@functools.partial(jax.jit,
                   static_argnames=("block_b", "out_lane_pad", "matmul_dtype"))
def mlp_forward(x, w1, b1, w2, b2, w3, b3, *, block_b=2048, out_lane_pad=8,
                matmul_dtype=jnp.float32):
    B, in_features = x.shape
    h1d = w1.shape[1]
    h2d = w2.shape[1]
    out_features = w3.shape[1]

    # ---- batch tile selection -------------------------------------------------
    # * multiple of 8 (f32 sublane)
    # * <= ceil(B/2) rounded to 8  -> grid has >=2 steps when B > 8 (v7x megacore)
    # * <= 4096 -> double-buffered (tb,4)+(tb,out) f32 tiles (~2 KiB/row total) fit
    #   comfortably under every generation's default scoped-VMEM limit (v5e 16 MiB).
    assert block_b % 8 == 0
    half_b = (B + 1) // 2
    tb = min(block_b, _round_up(half_b, 8), 4096)
    tb = max(tb, 8)
    grid = (pl.cdiv(B, tb),)        # ragged last tile is masked by Pallas (no jnp.pad)

    # ---- output lane pad (3 -> out_lane_pad; padded lanes softmax to ~0) -------
    n3p = _round_up(out_features, out_lane_pad)
    w3p = jnp.pad(w3, ((0, 0), (0, n3p - out_features)))
    b3p = jnp.pad(b3, ((0, 0), (0, n3p - out_features)), constant_values=_NEG_BIG)

    # ---- cast for the MXU once, in the wrapper (not per grid step) -------------
    xm = x.astype(matmul_dtype)
    w1m = w1.astype(matmul_dtype)
    w2m = w2.astype(matmul_dtype)
    w3m = w3p.astype(matmul_dtype)

    def resident(shape):            # weights / biases stay VMEM-resident
        return pl.BlockSpec(shape, lambda i: (0,) * len(shape))

    itemsize = jnp.dtype(matmul_dtype).itemsize
    cost = pl.CostEstimate(
        flops=2 * B * (in_features * h1d + h1d * h2d + h2d * out_features),
        transcendentals=B * n3p,
        bytes_accessed=(B * in_features * itemsize + B * n3p * 4
                        + (in_features * h1d + h1d * h2d + h2d * n3p) * itemsize
                        + (h1d + h2d + n3p) * 4),
    )

    out = pl.pallas_call(
        _mlp_softmax_kernel,
        out_shape=jax.ShapeDtypeStruct((B, n3p), jnp.float32),
        grid=grid,
        in_specs=[
            pl.BlockSpec((tb, in_features), lambda i: (i, 0)),   # streamed activations
            resident(w1m.shape), resident(b1.shape),
            resident(w2m.shape), resident(b2.shape),
            resident(w3m.shape), resident(b3p.shape),
        ],
        out_specs=pl.BlockSpec((tb, n3p), lambda i: (i, 0)),
        compiler_params=pltpu.CompilerParams(
            dimension_semantics=("parallel",)),                  # megacore shard on v7x
        cost_estimate=cost,
    )(xm, w1m, b1, w2m, b2, w3m, b3p)

    return out[:, :out_features]


def init_linear_params(key, fan_in, fan_out):
    """Mimic nn.Linear's U(-1/sqrt(fan_in), 1/sqrt(fan_in)); weight returned as (in, out)."""
    kw, kb = jax.random.split(key)
    bound = 1.0 / jnp.sqrt(fan_in)
    w = jax.random.uniform(kw, (fan_in, fan_out), jnp.float32, -bound, bound)
    b = jax.random.uniform(kb, (1, fan_out), jnp.float32, -bound, bound)
    return w, b


if __name__ == "__main__":
    in_features, h1, h2, out_features = 4, 16, 16, 3
    batch = 13                      # non-multiple of 8 -> exercises the masked ragged tile

    root = jax.random.PRNGKey(0)
    kx, k1, k2, k3 = jax.random.split(root, 4)

    x = jax.random.normal(kx, (batch, in_features), jnp.float32)
    w1, b1 = init_linear_params(k1, in_features, h1)
    w2, b2 = init_linear_params(k2, h1, h2)
    w3, b3 = init_linear_params(k3, h2, out_features)

    # reference in plain JAX (f32 path; note bf16 matmul_dtype would not meet 1e-5)
    def ref(x):
        a = jax.nn.relu(x @ w1 + b1)
        a = jax.nn.relu(a @ w2 + b2)
        return jax.nn.softmax(a @ w3 + b3, axis=-1)

    y_ref = ref(x)

    # Default path: 8-lane output pad (low writeback), 2-step grid (tb=8 for B=13).
    y = mlp_forward(x, w1, b1, w2, b2, w3, b3)
    jax.block_until_ready(y)
    assert y.shape == (batch, out_features)
    assert jnp.allclose(jnp.sum(y, axis=-1), 1.0, atol=1e-5)
    assert jnp.allclose(y, y_ref, atol=1e-5), "mismatch vs JAX reference (8-lane pad)"

    # Also exercise the 128-lane unmasked-store layout (preferred on v5e).
    y128 = mlp_forward(x, w1, b1, w2, b2, w3, b3, out_lane_pad=128)
    jax.block_until_ready(y128)
    assert jnp.allclose(y128, y_ref, atol=1e-5), "mismatch vs JAX reference (128-lane pad)"

    print("KERNEL_OK")
</pallas_src>

<mosaic_0001>
module attributes {stable_mosaic.version = 11 : i64} {
  func.func @_mlp_softmax_kernel(%arg0: i32, %arg1: memref<8x4xf32, #tpu.memory_space<vmem>>, %arg2: memref<4x16xf32, #tpu.memory_space<vmem>>, %arg3: memref<1x16xf32, #tpu.memory_space<vmem>>, %arg4: memref<16x16xf32, #tpu.memory_space<vmem>>, %arg5: memref<1x16xf32, #tpu.memory_space<vmem>>, %arg6: memref<16x8xf32, #tpu.memory_space<vmem>>, %arg7: memref<1x8xf32, #tpu.memory_space<vmem>>, %arg8: memref<8x8xf32, #tpu.memory_space<vmem>>) attributes {dimension_semantics = [#tpu.dimension_semantics<parallel>], iteration_bounds = array<i64: 2>, scalar_prefetch = 0 : i64, scratch_operands = 0 : i64, tpu.core_type = #tpu.core_type<tc>, window_params = [{transform_indices = @transform_0, window_bounds = array<i64: 8, 4>}, {pipeline_mode = #tpu.pipeline_mode<synchronous>, transform_indices = @transform_1, window_bounds = array<i64: 4, 16>}, {pipeline_mode = #tpu.pipeline_mode<synchronous>, transform_indices = @transform_2, window_bounds = array<i64: 1, 16>}, {pipeline_mode = #tpu.pipeline_mode<synchronous>, transform_indices = @transform_3, window_bounds = array<i64: 16, 16>}, {pipeline_mode = #tpu.pipeline_mode<synchronous>, transform_indices = @transform_4, window_bounds = array<i64: 1, 16>}, {pipeline_mode = #tpu.pipeline_mode<synchronous>, transform_indices = @transform_5, window_bounds = array<i64: 16, 8>}, {pipeline_mode = #tpu.pipeline_mode<synchronous>, transform_indices = @transform_6, window_bounds = array<i64: 1, 8>}, {transform_indices = @transform_7, window_bounds = array<i64: 8, 8>}]} {
    %c0 = arith.constant 0 : index
    %c0_0 = arith.constant 0 : index
    %0 = vector.load %arg1[%c0, %c0_0] : memref<8x4xf32, #tpu.memory_space<vmem>>, vector<8x4xf32>
    %c0_1 = arith.constant 0 : index
    %c0_2 = arith.constant 0 : index
    %1 = vector.load %arg2[%c0_1, %c0_2] : memref<4x16xf32, #tpu.memory_space<vmem>>, vector<4x16xf32>
    %cst = arith.constant dense<0.000000e+00> : vector<8x16xf32>
    %2 = tpu.matmul %0, %1, %cst {dimension_numbers = #tpu.dot_dimension_numbers<[1], [0], [0], [1], [0, 0, 1, 1], [], []>} : vector<8x4xf32>, vector<4x16xf32>, vector<8x16xf32> -> vector<8x16xf32>
    %c0_3 = arith.constant 0 : index
    %c0_4 = arith.constant 0 : index
    %3 = vector.load %arg3[%c0_3, %c0_4] : memref<1x16xf32, #tpu.memory_space<vmem>>, vector<1x16xf32>
    %4 = vector.broadcast %3 : vector<1x16xf32> to vector<8x16xf32>
    %5 = arith.addf %2, %4 : vector<8x16xf32>
    %cst_5 = arith.constant 0.000000e+00 : f32
    %6 = vector.broadcast %cst_5 : f32 to vector<8x16xf32>
    %7 = arith.maximumf %5, %6 : vector<8x16xf32>
    %c0_6 = arith.constant 0 : index
    %c0_7 = arith.constant 0 : index
    %8 = vector.load %arg4[%c0_6, %c0_7] : memref<16x16xf32, #tpu.memory_space<vmem>>, vector<16x16xf32>
    %cst_8 = arith.constant dense<0.000000e+00> : vector<8x16xf32>
    %9 = tpu.matmul %7, %8, %cst_8 {dimension_numbers = #tpu.dot_dimension_numbers<[1], [0], [0], [1], [0, 0, 1, 1], [], []>} : vector<8x16xf32>, vector<16x16xf32>, vector<8x16xf32> -> vector<8x16xf32>
    %c0_9 = arith.constant 0 : index
    %c0_10 = arith.constant 0 : index
    %10 = vector.load %arg5[%c0_9, %c0_10] : memref<1x16xf32, #tpu.memory_space<vmem>>, vector<1x16xf32>
    %11 = vector.broadcast %10 : vector<1x16xf32> to vector<8x16xf32>
    %12 = arith.addf %9, %11 : vector<8x16xf32>
    %cst_11 = arith.constant 0.000000e+00 : f32
    %13 = vector.broadcast %cst_11 : f32 to vector<8x16xf32>
    %14 = arith.maximumf %12, %13 : vector<8x16xf32>
    %c0_12 = arith.constant 0 : index
    %c0_13 = arith.constant 0 : index
    %15 = vector.load %arg6[%c0_12, %c0_13] : memref<16x8xf32, #tpu.memory_space<vmem>>, vector<16x8xf32>
    %cst_14 = arith.constant dense<0.000000e+00> : vector<8x8xf32>
    %16 = tpu.matmul %14, %15, %cst_14 {dimension_numbers = #tpu.dot_dimension_numbers<[1], [0], [0], [1], [0, 0, 1, 1], [], []>} : vector<8x16xf32>, vector<16x8xf32>, vector<8x8xf32> -> vector<8x8xf32>
    %c0_15 = arith.constant 0 : index
    %c0_16 = arith.constant 0 : index
    %17 = vector.load %arg7[%c0_15, %c0_16] : memref<1x8xf32, #tpu.memory_space<vmem>>, vector<1x8xf32>
    %18 = vector.broadcast %17 : vector<1x8xf32> to vector<8x8xf32>
    %19 = arith.addf %16, %18 : vector<8x8xf32>
    %cst_17 = arith.constant dense<0xFF800000> : vector<8xf32>
    %20 = vector.multi_reduction <maximumf>, %19, %cst_17 [1] : vector<8x8xf32> to vector<8xf32>
    %21 = vector.shape_cast %20 : vector<8xf32> to vector<8x1xf32>
    %22 = vector.broadcast %21 : vector<8x1xf32> to vector<8x8xf32>
    %23 = arith.subf %19, %22 : vector<8x8xf32>
    %24 = math.exp %23 : vector<8x8xf32>
    %cst_18 = arith.constant dense<0.000000e+00> : vector<8xf32>
    %25 = vector.multi_reduction <add>, %24, %cst_18 [1] : vector<8x8xf32> to vector<8xf32>
    %26 = vector.shape_cast %25 : vector<8xf32> to vector<8x1xf32>
    %27 = tpu.reciprocal %26 : vector<8x1xf32> -> vector<8x1xf32>
    %28 = vector.broadcast %27 : vector<8x1xf32> to vector<8x8xf32>
    %29 = arith.mulf %24, %28 : vector<8x8xf32>
    %c0_19 = arith.constant 0 : index
    %c0_20 = arith.constant 0 : index
    %30 = vector.load %arg8[%c0_19, %c0_20] : memref<8x8xf32, #tpu.memory_space<vmem>>, vector<8x8xf32>
    tpu.vector_store %arg8[%c0_19, %c0_20], %29 {strides = array<i32>} : memref<8x8xf32, #tpu.memory_space<vmem>>, vector<8x8xf32>,
    return
  }
  func.func @transform_0(%arg0: i32) -> (i32, i32) {
    %c0_i32 = arith.constant 0 : i32
    %c0_i32_0 = arith.constant 0 : i32
    return %arg0, %c0_i32 : i32, i32
  }
  func.func @transform_1(%arg0: i32) -> (i32, i32) {
    %c0_i32 = arith.constant 0 : i32
    %c0_i32_0 = arith.constant 0 : i32
    %c0_i32_1 = arith.constant 0 : i32
    return %c0_i32, %c0_i32_0 : i32, i32
  }
  func.func @transform_2(%arg0: i32) -> (i32, i32) {
    %c0_i32 = arith.constant 0 : i32
    %c0_i32_0 = arith.constant 0 : i32
    %c0_i32_1 = arith.constant 0 : i32
    return %c0_i32, %c0_i32_0 : i32, i32
  }
  func.func @transform_3(%arg0: i32) -> (i32, i32) {
    %c0_i32 = arith.constant 0 : i32
    %c0_i32_0 = arith.constant 0 : i32
    %c0_i32_1 = arith.constant 0 : i32
    return %c0_i32, %c0_i32_0 : i32, i32
  }
  func.func @transform_4(%arg0: i32) -> (i32, i32) {
    %c0_i32 = arith.constant 0 : i32
    %c0_i32_0 = arith.constant 0 : i32
    %c0_i32_1 = arith.constant 0 : i32
    return %c0_i32, %c0_i32_0 : i32, i32
  }
  func.func @transform_5(%arg0: i32) -> (i32, i32) {
    %c0_i32 = arith.constant 0 : i32
    %c0_i32_0 = arith.constant 0 : i32
    %c0_i32_1 = arith.constant 0 : i32
    return %c0_i32, %c0_i32_0 : i32, i32
  }
  func.func @transform_6(%arg0: i32) -> (i32, i32) {
    %c0_i32 = arith.constant 0 : i32
    %c0_i32_0 = arith.constant 0 : i32
    %c0_i32_1 = arith.constant 0 : i32
    return %c0_i32, %c0_i32_0 : i32, i32
  }
  func.func @transform_7(%arg0: i32) -> (i32, i32) {
    %c0_i32 = arith.constant 0 : i32
    %c0_i32_0 = arith.constant 0 : i32
    return %arg0, %c0_i32 : i32, i32
  }
}

</mosaic_0001>

<llo_original>
// kernel: mlp_forward.1
$region0: #{mlp_forward.1}
  #allocation0 [shape = 'u32[]', space=smem, size = 0x4, offset = 0x4, fixed_abs, tag = 'smem constant byte address 0x4 - core index']
  #allocation1 [shape = 'u32[144,128]{1,0:T(1,128)}', space=vmem, size = 0x12000, scoped, tag = 'internal scratch']
  %s0 = inlined_call_operand.vmem [shape: f32[13,4], index: 0, kind: input, shape index: {}]
  %s1 = inlined_call_operand.vmem [shape: f32[4,16], index: 1, kind: input, shape index: {}]
  %s2 = inlined_call_operand.vmem [shape: f32[1,16], index: 2, kind: input, shape index: {}]
  %s3 = inlined_call_operand.vmem [shape: f32[16,16], index: 3, kind: input, shape index: {}]
  %s4 = inlined_call_operand.vmem [shape: f32[1,16], index: 4, kind: input, shape index: {}]
  %s5 = inlined_call_operand.vmem [shape: f32[16,8], index: 5, kind: input, shape index: {}]
  %s6 = inlined_call_operand.vmem [shape: f32[1,8], index: 6, kind: input, shape index: {}]
  %s7 = inlined_call_operand.vmem [shape: f32[13,8], index: 7, kind: output, shape index: {}]
  %s8 = sld [smem:[#allocation0]]
  $region61: #{mlp_forward.1} parent=0
    _
  %s10 = ssub.s32 1, %s8
  %s11 = scalar_select 0, %s10, %s8
  loop: start=0, step=1, limit=4
  $region2: #{mlp_forward.1} parent=0 // loop_pre_header
    _
  $region3: #{mlp_forward.1} parent=0 // loop_header
    %s13 = sphi 0, %s17
    %p14 = scmp.ge.s32.totalorder %s13, 4
    %s23 = sphi 0, %s25
    %s26 = sphi 0, %s23
    %s27 = sphi 0, %s26
    %s43 = sphi 0, %s27
    %s47 = sphi 0, %s47
    %s49 = sphi 0, %s47
    %s50 = sphi 0, %s49
    %s64 = sphi 0, %s50
    %s68 = sphi 0, %s68
    %s70 = sphi 0, %s68
    %s71 = sphi 0, %s70
    %s85 = sphi 0, %s71
    %s89 = sphi 0, %s89
    %s91 = sphi 0, %s89
    %s92 = sphi 0, %s91
    %s106 = sphi 0, %s92
    %s110 = sphi 0, %s110
    %s112 = sphi 0, %s110
    %s113 = sphi 0, %s112
    %s127 = sphi 0, %s113
    %s131 = sphi 0, %s131
    %s133 = sphi 0, %s131
    %s134 = sphi 0, %s133
    %s148 = sphi 0, %s134
    %s152 = sphi 0, %s152
    %s154 = sphi 0, %s152
    %s155 = sphi 0, %s154
    %s169 = sphi 0, %s155
    %s175 = sphi 0, %s177
    %s178 = sphi 0, %s175
    %s179 = sphi 0, %s178
    %s195 = sphi 0, %s179
  $region4: #{mlp_forward.1} parent=0 // loop_header_branch
    %16 = sbr.rel (%p14) target = $region8
  $region5: #{mlp_forward.1} parent=0 // loop_body
    %s18 = ssub.s32 %s13, 1
    %s19 = ssub.s32 %s13, 2
    %s20 = sadd.s32 %s13, 1
    %s21 = ssub.s32 %s13, %s20
    %p22 = scmp.eq.s32.totalorder %s21, 0
    %s24 = sadd.s32 %s23, 1
    %s25 = scalar_select %p22, %s23, %s24
    %p28 = pneg %p22
    %p29 = scmp.eq.s32.totalorder %s13, 1
    %p30 = por %p28, %p29
    %p31 = scmp.ne.s32.totalorder %s23, %s26
    %p32 = scmp.eq.s32.totalorder %s13, 0
    %p33 = por %p31, %p32
    %p34 = scmp.ne.s32.totalorder %s23, %s26
    %p35 = scmp.eq.s32.totalorder %s18, 1
    %p36 = por %p34, %p35
    %p37 = scmp.ne.s32.totalorder %s26, %s27
    %p38 = scmp.eq.s32.totalorder %s18, 0
    %p39 = por %p37, %p38
    %p40 = scmp.ne.s32.totalorder %s26, %s27
    %p41 = scmp.eq.s32.totalorder %s19, 1
    %p42 = por %p40, %p41
    %p44 = scmp.ne.s32.totalorder %s27, %s43
    %p45 = scmp.eq.s32.totalorder %s19, 0
    %p46 = por %p44, %p45
    %s48 = sadd.s32 %s47, 1
    %p51 = scmp.eq.s32.totalorder %s13, 1
    %p52 = scmp.ne.s32.totalorder %s47, %s49
    %p53 = scmp.eq.s32.totalorder %s13, 0
    %p54 = por %p52, %p53
    %p55 = scmp.ne.s32.totalorder %s47, %s49
    %p56 = scmp.eq.s32.totalorder %s18, 1
    %p57 = por %p55, %p56
    %p58 = scmp.ne.s32.totalorder %s49, %s50
    %p59 = scmp.eq.s32.totalorder %s18, 0
    %p60 = por %p58, %p59
    %p61 = scmp.ne.s32.totalorder %s49, %s50
    %p62 = scmp.eq.s32.totalorder %s19, 1
    %p63 = por %p61, %p62
    %p65 = scmp.ne.s32.totalorder %s50, %s64
    %p66 = scmp.eq.s32.totalorder %s19, 0
    %p67 = por %p65, %p66
    %s69 = sadd.s32 %s68, 1
    %p72 = scmp.eq.s32.totalorder %s13, 1
    %p73 = scmp.ne.s32.totalorder %s68, %s70
    %p74 = scmp.eq.s32.totalorder %s13, 0
    %p75 = por %p73, %p74
    %p76 = scmp.ne.s32.totalorder %s68, %s70
    %p77 = scmp.eq.s32.totalorder %s18, 1
    %p78 = por %p76, %p77
    %p79 = scmp.ne.s32.totalorder %s70, %s71
    %p80 = scmp.eq.s32.totalorder %s18, 0
    %p81 = por %p79, %p80
    %p82 = scmp.ne.s32.totalorder %s70, %s71
    %p83 = scmp.eq.s32.totalorder %s19, 1
    %p84 = por %p82, %p83
    %p86 = scmp.ne.s32.totalorder %s71, %s85
    %p87 = scmp.eq.s32.totalorder %s19, 0
    %p88 = por %p86, %p87
    %s90 = sadd.s32 %s89, 1
    %p93 = scmp.eq.s32.totalorder %s13, 1
    %p94 = scmp.ne.s32.totalorder %s89, %s91
    %p95 = scmp.eq.s32.totalorder %s13, 0
    %p96 = por %p94, %p95
    %p97 = scmp.ne.s32.totalorder %s89, %s91
    %p98 = scmp.eq.s32.totalorder %s18, 1
    %p99 = por %p97, %p98
    %p100 = scmp.ne.s32.totalorder %s91, %s92
    %p101 = scmp.eq.s32.totalorder %s18, 0
    %p102 = por %p100, %p101
    %p103 = scmp.ne.s32.totalorder %s91, %s92
    %p104 = scmp.eq.s32.totalorder %s19, 1
    %p105 = por %p103, %p104
    %p107 = scmp.ne.s32.totalorder %s92, %s106
    %p108 = scmp.eq.s32.totalorder %s19, 0
    %p109 = por %p107, %p108
    %s111 = sadd.s32 %s110, 1
    %p114 = scmp.eq.s32.totalorder %s13, 1
    %p115 = scmp.ne.s32.totalorder %s110, %s112
    %p116 = scmp.eq.s32.totalorder %s13, 0
    %p117 = por %p115, %p116
    %p118 = scmp.ne.s32.totalorder %s110, %s112
    %p119 = scmp.eq.s32.totalorder %s18, 1
    %p120 = por %p118, %p119
    %p121 = scmp.ne.s32.totalorder %s112, %s113
    %p122 = scmp.eq.s32.totalorder %s18, 0
    %p123 = por %p121, %p122
    %p124 = scmp.ne.s32.totalorder %s112, %s113
    %p125 = scmp.eq.s32.totalorder %s19, 1
    %p126 = por %p124, %p125
    %p128 = scmp.ne.s32.totalorder %s113, %s127
    %p129 = scmp.eq.s32.totalorder %s19, 0
    %p130 = por %p128, %p129
    %s132 = sadd.s32 %s131, 1
    %p135 = scmp.eq.s32.totalorder %s13, 1
    %p136 = scmp.ne.s32.totalorder %s131, %s133
    %p137 = scmp.eq.s32.totalorder %s13, 0
    %p138 = por %p136, %p137
    %p139 = scmp.ne.s32.totalorder %s131, %s133
    %p140 = scmp.eq.s32.totalorder %s18, 1
    %p141 = por %p139, %p140
    %p142 = scmp.ne.s32.totalorder %s133, %s134
    %p143 = scmp.eq.s32.totalorder %s18, 0
    %p144 = por %p142, %p143
    %p145 = scmp.ne.s32.totalorder %s133, %s134
    %p146 = scmp.eq.s32.totalorder %s19, 1
    %p147 = por %p145, %p146
    %p149 = scmp.ne.s32.totalorder %s134, %s148
    %p150 = scmp.eq.s32.totalorder %s19, 0
    %p151 = por %p149, %p150
    %s153 = sadd.s32 %s152, 1
    %p156 = scmp.eq.s32.totalorder %s13, 1
    %p157 = scmp.ne.s32.totalorder %s152, %s154
    %p158 = scmp.eq.s32.totalorder %s13, 0
    %p159 = por %p157, %p158
    %p160 = scmp.ne.s32.totalorder %s152, %s154
    %p161 = scmp.eq.s32.totalorder %s18, 1
    %p162 = por %p160, %p161
    %p163 = scmp.ne.s32.totalorder %s154, %s155
    %p164 = scmp.eq.s32.totalorder %s18, 0
    %p165 = por %p163, %p164
    %p166 = scmp.ne.s32.totalorder %s154, %s155
    %p167 = scmp.eq.s32.totalorder %s19, 1
    %p168 = por %p166, %p167
    %p170 = scmp.ne.s32.totalorder %s155, %s169
    %p171 = scmp.eq.s32.totalorder %s19, 0
    %p172 = por %p170, %p171
    %s173 = ssub.s32 %s13, %s20
    %p174 = scmp.eq.s32.totalorder %s173, 0
    %s176 = sadd.s32 %s175, 1
    %s177 = scalar_select %p174, %s175, %s176
    %p180 = pneg %p174
    %p181 = scmp.eq.s32.totalorder %s13, 1
    %p182 = por %p180, %p181
    %p183 = scmp.ne.s32.totalorder %s175, %s178
    %p184 = scmp.eq.s32.totalorder %s13, 0
    %p185 = por %p183, %p184
    %p186 = scmp.ne.s32.totalorder %s175, %s178
    %p187 = scmp.eq.s32.totalorder %s18, 1
    %p188 = por %p186, %p187
    %p189 = scmp.ne.s32.totalorder %s178, %s179
    %p190 = scmp.eq.s32.totalorder %s18, 0
    %p191 = por %p189, %p190
    %p192 = scmp.ne.s32.totalorder %s178, %s179
    %p193 = scmp.eq.s32.totalorder %s19, 1
    %p194 = por %p192, %p193
    %p196 = scmp.ne.s32.totalorder %s179, %s195
    %p197 = scmp.eq.s32.totalorder %s19, 0
    %p198 = por %p196, %p197
    %p199 = scmp.le.s32.totalorder 1, %s13
    %p200 = scmp.lt.s32.totalorder %s13, 3
    %p201 = pnand %p199, %p200
    %p202 = pneg %p201
    // Predicated region
    $region9: #{mlp_forward.1} parent=5 // pred_check
      _
    $region10: #{mlp_forward.1} parent=5 // pred_check_branch
      %204 = sbr.rel (%p201) target = $region12
    $region11: #{mlp_forward.1} parent=5 // pred_region
      %s205 = ssub.s32 %s13, 1
      // Predicated region
      $region13: #{mlp_forward.1} parent=11 // pred_check
        %p206 = pneg %p60
      $region14: #{mlp_forward.1} parent=11 // pred_check_branch
        %208 = sbr.rel (%p206) target = $region16
      $region15: #{mlp_forward.1} parent=11 // pred_region
        _
      $region16: #{mlp_forward.1} parent=11 // pred_fallthru
        _
      // Predicated region
      $region17: #{mlp_forward.1} parent=11 // pred_check
        %p209 = pneg %p81
      $region18: #{mlp_forward.1} parent=11 // pred_check_branch
        %211 = sbr.rel (%p209) target = $region20
      $region19: #{mlp_forward.1} parent=11 // pred_region
        _
      $region20: #{mlp_forward.1} parent=11 // pred_fallthru
        _
      // Predicated region
      $region21: #{mlp_forward.1} parent=11 // pred_check
        %p212 = pneg %p102
      $region22: #{mlp_forward.1} parent=11 // pred_check_branch
        %214 = sbr.rel (%p212) target = $region24
      $region23: #{mlp_forward.1} parent=11 // pred_region
        _
      $region24: #{mlp_forward.1} parent=11 // pred_fallthru
        _
      // Predicated region
      $region25: #{mlp_forward.1} parent=11 // pred_check
        %p215 = pneg %p123
      $region26: #{mlp_forward.1} parent=11 // pred_check_branch
        %217 = sbr.rel (%p215) target = $region28
      $region27: #{mlp_forward.1} parent=11 // pred_region
        _
      $region28: #{mlp_forward.1} parent=11 // pred_fallthru
        _
      // Predicated region
      $region29: #{mlp_forward.1} parent=11 // pred_check
        %p218 = pneg %p144
      $region30: #{mlp_forward.1} parent=11 // pred_check_branch
        %220 = sbr.rel (%p218) target = $region32
      $region31: #{mlp_forward.1} parent=11 // pred_region
        _
      $region32: #{mlp_forward.1} parent=11 // pred_fallthru
        _
      // Predicated region
      $region33: #{mlp_forward.1} parent=11 // pred_check
        %p221 = pneg %p165
      $region34: #{mlp_forward.1} parent=11 // pred_check_branch
        %223 = sbr.rel (%p221) target = $region36
      $region35: #{mlp_forward.1} parent=11 // pred_region
        _
      $region36: #{mlp_forward.1} parent=11 // pred_fallthru
        _
    $region12: #{mlp_forward.1} parent=5 // pred_fallthru
      _
    %p224 = scmp.lt.s32.totalorder %s13, 2
    // Predicated region
    $region37: #{mlp_forward.1} parent=5 // pred_check
      %p225 = pneg %p224
    $region38: #{mlp_forward.1} parent=5 // pred_check_branch
      %227 = sbr.rel (%p225) target = $region40
    $region39: #{mlp_forward.1} parent=5 // pred_region
      // Predicated region
      $region41: #{mlp_forward.1} parent=39 // pred_check
        %p228 = pneg %p33
      $region42: #{mlp_forward.1} parent=39 // pred_check_branch
        %230 = sbr.rel (%p228) target = $region44
      $region43: #{mlp_forward.1} parent=39 // pred_region
        %p231 = scmp.lt.s32.totalorder %s13, 1
        %s232 = scalar_select %p231, %s13, 1
        %s233 = smul.addr %s232, 8
        %s234 = scalar_lea.vmem %s0, %s233
      $region44: #{mlp_forward.1} parent=39 // pred_fallthru
        _
    $region40: #{mlp_forward.1} parent=5 // pred_fallthru
      _
    %p235 = scmp.le.s32.totalorder 1, %s13
    %p236 = scmp.lt.s32.totalorder %s13, 3
    %p237 = pnand %p235, %p236
    %p238 = pneg %p237
    // Predicated region
    $region45: #{mlp_forward.1} parent=5 // pred_check
      _
    $region46: #{mlp_forward.1} parent=5 // pred_check_branch
      %240 = sbr.rel (%p237) target = $region48
    $region47: #{mlp_forward.1} parent=5 // pred_region
      %s241 = ssub.s32 %s13, 1
      %p242 = scmp.lt.s32.totalorder %s18, 1
      %s243 = scalar_select %p242, %s18, 1
      %s244 = smul.addr %s243, 8
      %s245 = scalar_lea.vmem %s0, %s244
      %p246 = pneg %p39
      %p247 = pneg %p36
      %p248 = pneg %p60
      %p249 = pneg %p57
      %p250 = pneg %p81
      %p251 = pneg %p78
      %p252 = pneg %p102
      %p253 = pneg %p99
      %p254 = pneg %p123
      %p255 = pneg %p120
      %p256 = pneg %p144
      %p257 = pneg %p141
      %p258 = pneg %p165
      %p259 = pneg %p162
      %p260 = pneg %p191
      %p261 = pneg %p188
      %p262 = scmp.lt.s32.totalorder %s18, 1
      %s263 = scalar_select %p262, %s18, 1
      %s264 = smul.addr %s263, 8
      %s265 = scalar_lea.vmem %s7, %s264
      %p266 = scmp.lt.s32.totalorder %s18, 1
      %s267 = scalar_select %p266, %s18, 1
      %s268 = smul.addr %s267, 8
      %s269 = scalar_lea.vmem %s0, %s268
      %p270 = scmp.lt.s32.totalorder %s18, 1
      %s271 = scalar_select %p270, %s18, 1
      %s272 = smul.addr %s271, 8
      %s273 = scalar_lea.vmem %s7, %s272
      %v274 = vld [vmem:[%s269] sm:$0xff]
      %v275 = vld [vmem:[%s1] sm:$0xf]
      %v276 = vld [vmem:[%s2] sm:$0x1]
      %v278 = vlaneseq
      %v279 = vshrl.u32 %v278, 7
      %v280 = vsub.s32 0, %v279
      %v281 = vrot.slane %v276, %v280
      %vm283 = vcmask 31744
      %v285 = vsel %vm283, %v274, 0
      %vm287 = vcmask 1043456
      %v289 = vsel %vm287, %v275, 0
      %291 = vmatprep.subr.mxu0 0.0
      %292 = vmatpush1.msra.mxu0 0.0
      %293 = vmatprep.subr.mxu0 0.0
      %294 = vmatpush1.msra.mxu0 0.0
      %295 = vmatprep.subr.mxu0 0.0
      %296 = vmatpush1.msra.mxu0 0.0
      %297 = vmatprep.subr.mxu0 0.0
      %298 = vmatpush1.msra.mxu0 0.0
      %299 = vmatprep.subr.mxu0 0.0
      %300 = vmatpush1.msra.mxu0 0.0
      %301 = vmatprep.subr.mxu0 0.0
      %302 = vmatpush1.msra.mxu0 0.0
      %303 = vmatprep.subr.mxu0 0.0
      %304 = vmatpush1.msra.mxu0 0.0
      %305 = vmatprep.subr.mxu0 0.0
      %306 = vmatpush1.msra.mxu0 0.0
      %307 = vmatprep.subr.mxu0 0.0
      %308 = vmatpush1.msra.mxu0 0.0
      %309 = vmatprep.subr.mxu0 0.0
      %310 = vmatpush1.msra.mxu0 0.0
      %311 = vmatprep.subr.mxu0 0.0
      %312 = vmatpush1.msra.mxu0 0.0
      %313 = vmatprep.subr.mxu0 0.0
      %314 = vmatpush1.msra.mxu0 0.0
      %315 = vmatprep.subr.mxu0 0.0
      %316 = vmatpush1.msra.mxu0 0.0
      %317 = vmatprep.subr.mxu0 0.0
      %318 = vmatpush1.msra.mxu0 0.0
      %319 = vmatprep.subr.mxu0 0.0
      %320 = vmatpush1.msra.mxu0 0.0
      %321 = vmatprep.subr.mxu0 0.0
      %322 = vmatpush1.msra.mxu0 %v289
      %323 = vmatprep.subr.mxu0 0.0
      %324 = vmatpush2.msra.mxu0 0.0
      %325 = vmatprep.subr.mxu0 0.0
      %326 = vmatpush2.msra.mxu0 0.0
      %327 = vmatprep.subr.mxu0 0.0
      %328 = vmatpush2.msra.mxu0 0.0
      %329 = vmatprep.subr.mxu0 0.0
      %330 = vmatpush2.msra.mxu0 0.0
      %331 = vmatprep.subr.mxu0 0.0
      %332 = vmatpush2.msra.mxu0 0.0
      %333 = vmatprep.subr.mxu0 0.0
      %334 = vmatpush2.msra.mxu0 0.0
      %335 = vmatprep.subr.mxu0 0.0
      %336 = vmatpush2.msra.mxu0 0.0
      %337 = vmatprep.subr.mxu0 0.0
      %338 = vmatpush2.msra.mxu0 0.0
      %339 = vmatprep.subr.mxu0 0.0
      %340 = vmatpush2.msra.mxu0 0.0
      %341 = vmatprep.subr.mxu0 0.0
      %342 = vmatpush2.msra.mxu0 0.0
      %343 = vmatprep.subr.mxu0 0.0
      %344 = vmatpush2.msra.mxu0 0.0
      %345 = vmatprep.subr.mxu0 0.0
      %346 = vmatpush2.msra.mxu0 0.0
      %347 = vmatprep.subr.mxu0 0.0
      %348 = vmatpush2.msra.mxu0 0.0
      %349 = vmatprep.subr.mxu0 0.0
      %350 = vmatpush2.msra.mxu0 0.0
      %351 = vmatprep.subr.mxu0 0.0
      %352 = vmatpush2.msra.mxu0 0.0
      %353 = vmatprep.subr.mxu0 0.0
      %354 = vmatpush2.msra.mxu0 0.0
      %355 = vmatprep.mubr.f32.mxu0 0.0
      %356 = vmatmul.mubr.f32.gmra.mxu0 %v285
      %v357 = vpop.f32.mrf.mxu0
      %v358 = vadd.f32 %v281, %v357
      %v359 = vpop.f32.mrf.mxu0
      %360 = vdwg.mxu0
      %v361 = vmax.f32 %v358, 0.0
      %v362 = vld [vmem:[%s3] sm:$0xff]
      %v363 = vld [vmem:[%s3 + $0x8] sm:$0xff]
      %v364 = vld [vmem:[%s4] sm:$0x1]
      %v366 = vlaneseq
      %v367 = vshrl.u32 %v366, 7
      %v368 = vsub.s32 0, %v367
      %v369 = vrot.slane %v364, %v368
      %vm371 = vcmask 130048
      %v373 = vsel %vm371, %v361, 0
      %375 = vmatprep.subr.mxu0 0.0
      %376 = vmatpush1.msra.mxu0 0.0
      %377 = vmatprep.subr.mxu0 0.0
      %378 = vmatpush1.msra.mxu0 0.0
      %379 = vmatprep.subr.mxu0 0.0
      %380 = vmatpush1.msra.mxu0 0.0
      %381 = vmatprep.subr.mxu0 0.0
      %382 = vmatpush1.msra.mxu0 0.0
      %383 = vmatprep.subr.mxu0 0.0
      %384 = vmatpush1.msra.mxu0 0.0
      %385 = vmatprep.subr.mxu0 0.0
      %386 = vmatpush1.msra.mxu0 0.0
      %387 = vmatprep.subr.mxu0 0.0
      %388 = vmatpush1.msra.mxu0 0.0
      %389 = vmatprep.subr.mxu0 0.0
      %390 = vmatpush1.msra.mxu0 0.0
      %391 = vmatprep.subr.mxu0 0.0
      %392 = vmatpush1.msra.mxu0 0.0
      %393 = vmatprep.subr.mxu0 0.0
      %394 = vmatpush1.msra.mxu0 0.0
      %395 = vmatprep.subr.mxu0 0.0
      %396 = vmatpush1.msra.mxu0 0.0
      %397 = vmatprep.subr.mxu0 0.0
      %398 = vmatpush1.msra.mxu0 0.0
      %399 = vmatprep.subr.mxu0 0.0
      %400 = vmatpush1.msra.mxu0 0.0
      %401 = vmatprep.subr.mxu0 0.0
      %402 = vmatpush1.msra.mxu0 0.0
      %403 = vmatprep.subr.mxu0 0.0
      %404 = vmatpush1.msra.mxu0 %v363
      %405 = vmatprep.subr.mxu0 0.0
      %406 = vmatpush1.msra.mxu0 %v362
      %407 = vmatprep.subr.mxu0 0.0
      %408 = vmatpush2.msra.mxu0 0.0
      %409 = vmatprep.subr.mxu0 0.0
      %410 = vmatpush2.msra.mxu0 0.0
      %411 = vmatprep.subr.mxu0 0.0
      %412 = vmatpush2.msra.mxu0 0.0
      %413 = vmatprep.subr.mxu0 0.0
      %414 = vmatpush2.msra.mxu0 0.0
      %415 = vmatprep.subr.mxu0 0.0
      %416 = vmatpush2.msra.mxu0 0.0
      %417 = vmatprep.subr.mxu0 0.0
      %418 = vmatpush2.msra.mxu0 0.0
      %419 = vmatprep.subr.mxu0 0.0
      %420 = vmatpush2.msra.mxu0 0.0
      %421 = vmatprep.subr.mxu0 0.0
      %422 = vmatpush2.msra.mxu0 0.0
      %423 = vmatprep.subr.mxu0 0.0
      %424 = vmatpush2.msra.mxu0 0.0
      %425 = vmatprep.subr.mxu0 0.0
      %426 = vmatpush2.msra.mxu0 0.0
      %427 = vmatprep.subr.mxu0 0.0
      %428 = vmatpush2.msra.mxu0 0.0
      %429 = vmatprep.subr.mxu0 0.0
      %430 = vmatpush2.msra.mxu0 0.0
      %431 = vmatprep.subr.mxu0 0.0
      %432 = vmatpush2.msra.mxu0 0.0
      %433 = vmatprep.subr.mxu0 0.0
      %434 = vmatpush2.msra.mxu0 0.0
      %435 = vmatprep.subr.mxu0 0.0
      %436 = vmatpush2.msra.mxu0 0.0
      %437 = vmatprep.subr.mxu0 0.0
      %438 = vmatpush2.msra.mxu0 0.0
      %439 = vmatprep.mubr.f32.mxu0 0.0
      %440 = vmatmul.mubr.f32.gmra.mxu0 %v373
      %v441 = vpop.f32.mrf.mxu0
      %v442 = vadd.f32 %v369, %v441
      %v443 = vpop.f32.mrf.mxu0
      %444 = vdwg.mxu0
      %v445 = vmax.f32 %v442, 0.0
      %v446 = vld [vmem:[%s5] sm:$0xff]
      %v447 = vld [vmem:[%s5 + $0x8] sm:$0xff]
      %v448 = vld [vmem:[%s6] sm:$0x1]
      %v450 = vlaneseq
      %v451 = vshrl.u32 %v450, 7
      %v452 = vsub.s32 0, %v451
      %v453 = vrot.slane %v448, %v452
      %v456 = vsel %vm371, %v445, 0
      %458 = vmatprep.subr.mxu0 0.0
      %459 = vmatpush1.msra.mxu0 0.0
      %460 = vmatprep.subr.mxu0 0.0
      %461 = vmatpush1.msra.mxu0 0.0
      %462 = vmatprep.subr.mxu0 0.0
      %463 = vmatpush1.msra.mxu0 0.0
      %464 = vmatprep.subr.mxu0 0.0
      %465 = vmatpush1.msra.mxu0 0.0
      %466 = vmatprep.subr.mxu0 0.0
      %467 = vmatpush1.msra.mxu0 0.0
      %468 = vmatprep.subr.mxu0 0.0
      %469 = vmatpush1.msra.mxu0 0.0
      %470 = vmatprep.subr.mxu0 0.0
      %471 = vmatpush1.msra.mxu0 0.0
      %472 = vmatprep.subr.mxu0 0.0
      %473 = vmatpush1.msra.mxu0 0.0
      %474 = vmatprep.subr.mxu0 0.0
      %475 = vmatpush1.msra.mxu0 0.0
      %476 = vmatprep.subr.mxu0 0.0
      %477 = vmatpush1.msra.mxu0 0.0
      %478 = vmatprep.subr.mxu0 0.0
      %479 = vmatpush1.msra.mxu0 0.0
      %480 = vmatprep.subr.mxu0 0.0
      %481 = vmatpush1.msra.mxu0 0.0
      %482 = vmatprep.subr.mxu0 0.0
      %483 = vmatpush1.msra.mxu0 0.0
      %484 = vmatprep.subr.mxu0 0.0
      %485 = vmatpush1.msra.mxu0 0.0
      %486 = vmatprep.subr.mxu0 0.0
      %487 = vmatpush1.msra.mxu0 %v447
      %488 = vmatprep.subr.mxu0 0.0
      %489 = vmatpush1.msra.mxu0 %v446
      %490 = vmatprep.subr.mxu0 0.0
      %491 = vmatpush2.msra.mxu0 0.0
      %492 = vmatprep.subr.mxu0 0.0
      %493 = vmatpush2.msra.mxu0 0.0
      %494 = vmatprep.subr.mxu0 0.0
      %495 = vmatpush2.msra.mxu0 0.0
      %496 = vmatprep.subr.mxu0 0.0
      %497 = vmatpush2.msra.mxu0 0.0
      %498 = vmatprep.subr.mxu0 0.0
      %499 = vmatpush2.msra.mxu0 0.0
      %500 = vmatprep.subr.mxu0 0.0
      %501 = vmatpush2.msra.mxu0 0.0
      %502 = vmatprep.subr.mxu0 0.0
      %503 = vmatpush2.msra.mxu0 0.0
      %504 = vmatprep.subr.mxu0 0.0
      %505 = vmatpush2.msra.mxu0 0.0
      %506 = vmatprep.subr.mxu0 0.0
      %507 = vmatpush2.msra.mxu0 0.0
      %508 = vmatprep.subr.mxu0 0.0
      %509 = vmatpush2.msra.mxu0 0.0
      %510 = vmatprep.subr.mxu0 0.0
      %511 = vmatpush2.msra.mxu0 0.0
      %512 = vmatprep.subr.mxu0 0.0
      %513 = vmatpush2.msra.mxu0 0.0
      %514 = vmatprep.subr.mxu0 0.0
      %515 = vmatpush2.msra.mxu0 0.0
      %516 = vmatprep.subr.mxu0 0.0
      %517 = vmatpush2.msra.mxu0 0.0
      %518 = vmatprep.subr.mxu0 0.0
      %519 = vmatpush2.msra.mxu0 0.0
      %520 = vmatprep.subr.mxu0 0.0
      %521 = vmatpush2.msra.mxu0 0.0
      %522 = vmatprep.mubr.f32.mxu0 0.0
      %523 = vmatmul.mubr.f32.gmra.mxu0 %v456
      %v524 = vpop.f32.mrf.mxu0
      %v525 = vadd.f32 %v453, %v524
      %v526 = vpop.f32.mrf.mxu0
      %527 = vdwg.mxu0
      %vm528 = vcmask 64512
      %v529 = vsel %vm528, %v525, -inf
      %530 = vmax.xlane.f32.xlu0 %v529
      %v531 = vpop.xlane.xlu0 %530
      %v532 = vsub.f32 %v525, %v531
      %v533 = vmul.f32 %v532, 1.442695
      %v534 = vpow.pop %v533
      %v535 = vsel %vm528, %v534, 0.0
      %536 = vadd.xlane.f32.xlu0 %v535
      %v537 = vpop.xlane.xlu0 %536
      %v538 = vrcp.pop %v537
      %v539 = vmul.f32 %v534, %v538
      %540 = vst.msk [vmem:[%s273] sm:$0xff] %vm528, %v539
      %p541 = scmp.lt.s32.totalorder %s18, 1
      %s542 = scalar_select %p541, %s18, 1
      %s543 = smul.addr %s542, 8
      %s544 = scalar_lea.vmem %s7, %s543
      // Predicated region
      $region49: #{mlp_forward.1} parent=47 // pred_check
        %p545 = pneg %p188
      $region50: #{mlp_forward.1} parent=47 // pred_check_branch
        %547 = sbr.rel (%p545) target = $region52
      $region51: #{mlp_forward.1} parent=47 // pred_region
        _
      $region52: #{mlp_forward.1} parent=47 // pred_fallthru
        _
    $region48: #{mlp_forward.1} parent=5 // pred_fallthru
      _
    %p548 = scmp.le.s32.totalorder 2, %s13
    // Predicated region
    $region53: #{mlp_forward.1} parent=5 // pred_check
      %p549 = pneg %p548
    $region54: #{mlp_forward.1} parent=5 // pred_check_branch
      %551 = sbr.rel (%p549) target = $region56
    $region55: #{mlp_forward.1} parent=5 // pred_region
      %s552 = ssub.s32 %s13, 2
      // Predicated region
      $region57: #{mlp_forward.1} parent=55 // pred_check
        %p553 = pneg %p194
      $region58: #{mlp_forward.1} parent=55 // pred_check_branch
        %555 = sbr.rel (%p553) target = $region60
      $region59: #{mlp_forward.1} parent=55 // pred_region
        %p556 = scmp.lt.s32.totalorder %s19, 1
        %s557 = scalar_select %p556, %s19, 1
        %s558 = smul.addr %s557, 8
        %s559 = scalar_lea.vmem %s7, %s558
      $region60: #{mlp_forward.1} parent=55 // pred_fallthru
        _
    $region56: #{mlp_forward.1} parent=5 // pred_fallthru
      _
  $region6: #{mlp_forward.1} parent=0 // loop_footer
    %s17 = sadd.s32 1, %s13
  $region7: #{mlp_forward.1} parent=0 // loop_footer_branch
    %12 = sbr.rel target = $region3
  $region8: #{mlp_forward.1} parent=0 // loop_exit
    _

</llo_original>
